<compile_context>
chip_gen: v5e
topology: v5e:2x2
jax: 0.10.0
libtpu: 0.0.40
codegen_flags: <defaults>
</compile_context>

<pallas_src>
import functools

import jax
import jax.numpy as jnp
import numpy as np
from jax.experimental import pallas as pl
from jax.experimental.pallas import tpu as pltpu


# ----------------------------------------------------------------------------
# Pallas kernel: whole sequence in one invocation, everything VMEM-resident.
# ----------------------------------------------------------------------------
def prednet_kernel(x_ref, h0_ref, c0_ref, wih_ref, whh_ref, b_ref,
                   wfc_ref, bfc_ref,
                   y_ref, state_ref, *, seq_len, batch):
    H = h0_ref.shape[-1]

    # Hoisted non-recurrent projection for ALL timesteps at once:
    #   (T*Bp, I) @ (I, 4H) + b  ->  (T*Bp, 4H), gate columns ordered (i, f, o, g).
    xw = (jnp.dot(x_ref[...], wih_ref[...], preferred_element_type=jnp.float32)
          + b_ref[...])

    whh = whh_ref[...]          # (H, 4H), loaded once
    h = h0_ref[...]             # (Bp, H)
    c = c0_ref[...]             # (Bp, H)

    # Serial recurrence over time; T is tiny and static -> fully unrolled,
    # all slices static and sublane-aligned (Bp is a multiple of 8).
    hs = []
    for t in range(seq_len):
        row = t * batch
        gates = xw[row:row + batch, :] + jnp.dot(
            h, whh, preferred_element_type=jnp.float32)        # (Bp, 4H)

        # Grouped activations: one sigmoid over (i, f, o), one tanh over g.
        sig = jax.nn.sigmoid(gates[:, :3 * H])
        i_g = sig[:, 0 * H:1 * H]
        f_g = sig[:, 1 * H:2 * H]
        o_g = sig[:, 2 * H:3 * H]
        g_g = jnp.tanh(gates[:, 3 * H:])

        c = f_g * c + i_g * g_g
        h = o_g * jnp.tanh(c)
        hs.append(h)                                           # register-resident

    # One stacked value, one FC matmul, one full-lane-dense store (no scratch
    # round trip, no masked sub-tile stores).  Dropout (eval mode) is identity.
    hs_all = jnp.concatenate(hs, axis=0)                       # (T*Bp, H)
    y_ref[...] = (jnp.dot(hs_all, wfc_ref[...],
                          preferred_element_type=jnp.float32)
                  + bfc_ref[...])                              # (T*Bp, 128)

    # h_n / c_n merged into a single lane-dense (Bp, 128) tile, written once.
    pad = state_ref.shape[-1] - 2 * H
    parts = [h, c]
    if pad > 0:
        parts.append(jnp.zeros((batch, pad), jnp.float32))
    state_ref[...] = jnp.concatenate(parts, axis=-1)


# ----------------------------------------------------------------------------
# Wrapper: parameter plumbing + padding + pallas_call.
# ----------------------------------------------------------------------------
def _permute_gates(w):
    """Reorder PyTorch LSTM gate blocks (i, f, g, o) -> (i, f, o, g) on axis 0."""
    H = w.shape[0] // 4
    return jnp.concatenate([w[:2 * H], w[3 * H:], w[2 * H:3 * H]], axis=0)


@jax.jit
def prednet_forward(x, params, h0, c0):
    """x: (B, T, I) float32.  Returns (y:(B,T,O), (h_n:(1,B,H), c_n:(1,B,H)))."""
    B, T, I = x.shape
    H = params["w_hh"].shape[1]
    O = params["w_fc"].shape[0]

    Bp = ((B + 7) // 8) * 8                      # pad batch to a sublane tile
    Op = ((O + 127) // 128) * 128                # pad FC output to a lane tile
    Sp = max(128, ((2 * H + 127) // 128) * 128)  # merged (h_n, c_n) lane width

    # Glue (pure layout work in XLA): batch-padded, time-major flattened input,
    # transposed weights with gate columns permuted to (i, f, o, g), FC weight
    # and bias zero-padded to Op lanes.
    x_pad = jnp.zeros((Bp, T, I), jnp.float32).at[:B].set(x.astype(jnp.float32))
    x2d = jnp.transpose(x_pad, (1, 0, 2)).reshape(T * Bp, I)
    h0_p = jnp.zeros((Bp, H), jnp.float32).at[:B].set(h0.astype(jnp.float32))
    c0_p = jnp.zeros((Bp, H), jnp.float32).at[:B].set(c0.astype(jnp.float32))

    wih_t = _permute_gates(params["w_ih"]).T.astype(jnp.float32)     # (I, 4H)
    whh_t = _permute_gates(params["w_hh"]).T.astype(jnp.float32)     # (H, 4H)
    b_lstm = _permute_gates(params["b_ih"] + params["b_hh"]
                            ).reshape(1, 4 * H).astype(jnp.float32)  # (1, 4H)
    wfc_t = jnp.zeros((H, Op), jnp.float32).at[:, :O].set(
        params["w_fc"].T.astype(jnp.float32))                        # (H, Op)
    b_fc = jnp.zeros((1, Op), jnp.float32).at[:, :O].set(
        params["b_fc"].astype(jnp.float32))                          # (1, Op)

    kernel = functools.partial(prednet_kernel, seq_len=T, batch=Bp)

    grid_spec = pltpu.PrefetchScalarGridSpec(
        num_scalar_prefetch=0,
        grid=(1,),                                          # single invocation
        in_specs=[
            pl.BlockSpec((T * Bp, I), lambda i: (0, 0)),    # x (time-major, flat)
            pl.BlockSpec((Bp, H), lambda i: (0, 0)),        # h0
            pl.BlockSpec((Bp, H), lambda i: (0, 0)),        # c0
            pl.BlockSpec((I, 4 * H), lambda i: (0, 0)),     # W_ih^T (i,f,o,g)
            pl.BlockSpec((H, 4 * H), lambda i: (0, 0)),     # W_hh^T (i,f,o,g)
            pl.BlockSpec((1, 4 * H), lambda i: (0, 0)),     # b_ih + b_hh
            pl.BlockSpec((H, Op), lambda i: (0, 0)),        # W_fc^T (lane-padded)
            pl.BlockSpec((1, Op), lambda i: (0, 0)),        # b_fc  (lane-padded)
        ],
        out_specs=[
            pl.BlockSpec((T * Bp, Op), lambda i: (0, 0)),   # y (lane-dense slab)
            pl.BlockSpec((Bp, Sp), lambda i: (0, 0)),       # merged h_n | c_n
        ],
    )

    y2d, state = pl.pallas_call(
        kernel,
        out_shape=(
            jax.ShapeDtypeStruct((T * Bp, Op), jnp.float32),
            jax.ShapeDtypeStruct((Bp, Sp), jnp.float32),
        ),
        grid_spec=grid_spec,
        compiler_params=pltpu.CompilerParams(
            dimension_semantics=("arbitrary",),
        ),
    )(x2d, h0_p, c0_p, wih_t, whh_t, b_lstm, wfc_t, b_fc)

    # Slice away batch / lane padding; back to (B, T, O) and PyTorch-style states.
    y = jnp.transpose(y2d.reshape(T, Bp, Op), (1, 0, 2))[:B, :, :O]
    h_n = state[:B, :H]
    c_n = state[:B, H:2 * H]
    return y, (h_n[None, :, :], c_n[None, :, :])


# ----------------------------------------------------------------------------
# Deterministic parameter init (PyTorch-style uniform(-1/sqrt(H), 1/sqrt(H))).
# ----------------------------------------------------------------------------
def init_params(key, input_size, hidden_size, output_size):
    ks = jax.random.split(key, 6)
    bound = 1.0 / np.sqrt(hidden_size)
    u = lambda k, shape: jax.random.uniform(
        k, shape, dtype=jnp.float32, minval=-bound, maxval=bound)
    return {
        "w_ih": u(ks[0], (4 * hidden_size, input_size)),
        "w_hh": u(ks[1], (4 * hidden_size, hidden_size)),
        "b_ih": u(ks[2], (4 * hidden_size,)),
        "b_hh": u(ks[3], (4 * hidden_size,)),
        "w_fc": u(ks[4], (output_size, hidden_size)),
        "b_fc": u(ks[5], (output_size,)),
    }


# ----------------------------------------------------------------------------
# Pure-JAX reference (mirrors torch.nn.LSTM + Linear, eval-mode dropout).
# Uses the standard PyTorch gate order -- validates the kernel's permutation.
# ----------------------------------------------------------------------------
def prednet_reference(x, params, h0, c0):
    B, T, I = x.shape
    H = params["w_hh"].shape[1]
    wih_t = params["w_ih"].T
    whh_t = params["w_hh"].T
    b = params["b_ih"] + params["b_hh"]

    def step(carry, x_t):
        h, c = carry
        gates = x_t @ wih_t + h @ whh_t + b
        i = jax.nn.sigmoid(gates[:, 0 * H:1 * H])
        f = jax.nn.sigmoid(gates[:, 1 * H:2 * H])
        g = jnp.tanh(gates[:, 2 * H:3 * H])
        o = jax.nn.sigmoid(gates[:, 3 * H:4 * H])
        c_new = f * c + i * g
        h_new = o * jnp.tanh(c_new)
        return (h_new, c_new), h_new

    (h_n, c_n), hs = jax.lax.scan(step, (h0, c0), jnp.transpose(x, (1, 0, 2)))
    hs = jnp.transpose(hs, (1, 0, 2))                       # (B, T, H)
    y = hs @ params["w_fc"].T + params["b_fc"]
    return y, (h_n[None], c_n[None])


if __name__ == "__main__":
    # Small shapes consistent with PredNet(input_size, hidden_size, output_size)
    B, T = 2, 8
    INPUT_SIZE, HIDDEN_SIZE, OUTPUT_SIZE = 16, 32, 8

    key = jax.random.PRNGKey(0)
    k_x, k_p = jax.random.split(key)

    x = jax.random.normal(k_x, (B, T, INPUT_SIZE), dtype=jnp.float32)
    params = init_params(k_p, INPUT_SIZE, HIDDEN_SIZE, OUTPUT_SIZE)

    # hidden=None in PyTorch -> zero initial states
    h0 = jnp.zeros((B, HIDDEN_SIZE), dtype=jnp.float32)
    c0 = jnp.zeros((B, HIDDEN_SIZE), dtype=jnp.float32)

    y, (h_n, c_n) = prednet_forward(x, params, h0, c0)
    jax.block_until_ready((y, h_n, c_n))

    y_ref, (h_ref, c_ref) = prednet_reference(x, params, h0, c0)
    np.testing.assert_allclose(np.asarray(y), np.asarray(y_ref), atol=1e-4, rtol=1e-4)
    np.testing.assert_allclose(np.asarray(h_n), np.asarray(h_ref), atol=1e-4, rtol=1e-4)
    np.testing.assert_allclose(np.asarray(c_n), np.asarray(c_ref), atol=1e-4, rtol=1e-4)

    print("KERNEL_OK")
</pallas_src>

<mosaic_0001>
module attributes {stable_mosaic.version = 11 : i64} {
  func.func @prednet_kernel(%arg0: i32, %arg1: memref<64x16xf32, #tpu.memory_space<vmem>>, %arg2: memref<8x32xf32, #tpu.memory_space<vmem>>, %arg3: memref<8x32xf32, #tpu.memory_space<vmem>>, %arg4: memref<16x128xf32, #tpu.memory_space<vmem>>, %arg5: memref<32x128xf32, #tpu.memory_space<vmem>>, %arg6: memref<1x128xf32, #tpu.memory_space<vmem>>, %arg7: memref<32x128xf32, #tpu.memory_space<vmem>>, %arg8: memref<1x128xf32, #tpu.memory_space<vmem>>, %arg9: memref<64x128xf32, #tpu.memory_space<vmem>>, %arg10: memref<8x128xf32, #tpu.memory_space<vmem>>) attributes {dimension_semantics = [#tpu.dimension_semantics<arbitrary>], iteration_bounds = array<i64: 1>, scalar_prefetch = 0 : i64, scratch_operands = 0 : i64, tpu.core_type = #tpu.core_type<tc>, window_params = [{pipeline_mode = #tpu.pipeline_mode<synchronous>, transform_indices = @transform_0, window_bounds = array<i64: 64, 16>}, {pipeline_mode = #tpu.pipeline_mode<synchronous>, transform_indices = @transform_1, window_bounds = array<i64: 8, 32>}, {pipeline_mode = #tpu.pipeline_mode<synchronous>, transform_indices = @transform_2, window_bounds = array<i64: 8, 32>}, {pipeline_mode = #tpu.pipeline_mode<synchronous>, transform_indices = @transform_3, window_bounds = array<i64: 16, 128>}, {pipeline_mode = #tpu.pipeline_mode<synchronous>, transform_indices = @transform_4, window_bounds = array<i64: 32, 128>}, {pipeline_mode = #tpu.pipeline_mode<synchronous>, transform_indices = @transform_5, window_bounds = array<i64: 1, 128>}, {pipeline_mode = #tpu.pipeline_mode<synchronous>, transform_indices = @transform_6, window_bounds = array<i64: 32, 128>}, {pipeline_mode = #tpu.pipeline_mode<synchronous>, transform_indices = @transform_7, window_bounds = array<i64: 1, 128>}, {pipeline_mode = #tpu.pipeline_mode<synchronous>, transform_indices = @transform_8, window_bounds = array<i64: 64, 128>}, {pipeline_mode = #tpu.pipeline_mode<synchronous>, transform_indices = @transform_9, window_bounds = array<i64: 8, 128>}]} {
    %c0 = arith.constant 0 : index
    %c0_0 = arith.constant 0 : index
    %0 = vector.load %arg1[%c0, %c0_0] : memref<64x16xf32, #tpu.memory_space<vmem>>, vector<64x16xf32>
    %c0_1 = arith.constant 0 : index
    %c0_2 = arith.constant 0 : index
    %1 = vector.load %arg4[%c0_1, %c0_2] : memref<16x128xf32, #tpu.memory_space<vmem>>, vector<16x128xf32>
    %cst = arith.constant dense<0.000000e+00> : vector<64x128xf32>
    %2 = tpu.matmul %0, %1, %cst {dimension_numbers = #tpu.dot_dimension_numbers<[1], [0], [0], [1], [0, 0, 1, 1], [], []>} : vector<64x16xf32>, vector<16x128xf32>, vector<64x128xf32> -> vector<64x128xf32>
    %c0_3 = arith.constant 0 : index
    %c0_4 = arith.constant 0 : index
    %3 = vector.load %arg6[%c0_3, %c0_4] : memref<1x128xf32, #tpu.memory_space<vmem>>, vector<1x128xf32>
    %4 = vector.broadcast %3 : vector<1x128xf32> to vector<64x128xf32>
    %5 = arith.addf %2, %4 : vector<64x128xf32>
    %c0_5 = arith.constant 0 : index
    %c0_6 = arith.constant 0 : index
    %6 = vector.load %arg5[%c0_5, %c0_6] : memref<32x128xf32, #tpu.memory_space<vmem>>, vector<32x128xf32>
    %c0_7 = arith.constant 0 : index
    %c0_8 = arith.constant 0 : index
    %7 = vector.load %arg2[%c0_7, %c0_8] : memref<8x32xf32, #tpu.memory_space<vmem>>, vector<8x32xf32>
    %c0_9 = arith.constant 0 : index
    %c0_10 = arith.constant 0 : index
    %8 = vector.load %arg3[%c0_9, %c0_10] : memref<8x32xf32, #tpu.memory_space<vmem>>, vector<8x32xf32>
    %9 = vector.extract_strided_slice %5 {offsets = [0, 0], sizes = [8, 128], strides = [1, 1]} : vector<64x128xf32> to vector<8x128xf32>
    %cst_11 = arith.constant dense<0.000000e+00> : vector<8x128xf32>
    %10 = tpu.matmul %7, %6, %cst_11 {dimension_numbers = #tpu.dot_dimension_numbers<[1], [0], [0], [1], [0, 0, 1, 1], [], []>} : vector<8x32xf32>, vector<32x128xf32>, vector<8x128xf32> -> vector<8x128xf32>
    %11 = arith.addf %9, %10 : vector<8x128xf32>
    %12 = vector.extract_strided_slice %11 {offsets = [0, 0], sizes = [8, 96], strides = [1, 1]} : vector<8x128xf32> to vector<8x96xf32>
    %13 = arith.negf %12 : vector<8x96xf32>
    %14 = math.exp %13 : vector<8x96xf32>
    %cst_12 = arith.constant 1.000000e+00 : f32
    %15 = vector.broadcast %cst_12 : f32 to vector<8x96xf32>
    %16 = arith.addf %15, %14 : vector<8x96xf32>
    %17 = arith.divf %15, %16 : vector<8x96xf32>
    %18 = vector.extract_strided_slice %17 {offsets = [0, 0], sizes = [8, 32], strides = [1, 1]} : vector<8x96xf32> to vector<8x32xf32>
    %19 = vector.extract_strided_slice %17 {offsets = [0, 32], sizes = [8, 32], strides = [1, 1]} : vector<8x96xf32> to vector<8x32xf32>
    %20 = vector.extract_strided_slice %17 {offsets = [0, 64], sizes = [8, 32], strides = [1, 1]} : vector<8x96xf32> to vector<8x32xf32>
    %21 = vector.extract_strided_slice %11 {offsets = [0, 96], sizes = [8, 32], strides = [1, 1]} : vector<8x128xf32> to vector<8x32xf32>
    %22 = math.tanh %21 : vector<8x32xf32>
    %23 = arith.mulf %19, %8 : vector<8x32xf32>
    %24 = arith.mulf %18, %22 : vector<8x32xf32>
    %25 = arith.addf %23, %24 : vector<8x32xf32>
    %26 = math.tanh %25 : vector<8x32xf32>
    %27 = arith.mulf %20, %26 : vector<8x32xf32>
    %28 = vector.extract_strided_slice %5 {offsets = [8, 0], sizes = [8, 128], strides = [1, 1]} : vector<64x128xf32> to vector<8x128xf32>
    %cst_13 = arith.constant dense<0.000000e+00> : vector<8x128xf32>
    %29 = tpu.matmul %27, %6, %cst_13 {dimension_numbers = #tpu.dot_dimension_numbers<[1], [0], [0], [1], [0, 0, 1, 1], [], []>} : vector<8x32xf32>, vector<32x128xf32>, vector<8x128xf32> -> vector<8x128xf32>
    %30 = arith.addf %28, %29 : vector<8x128xf32>
    %31 = vector.extract_strided_slice %30 {offsets = [0, 0], sizes = [8, 96], strides = [1, 1]} : vector<8x128xf32> to vector<8x96xf32>
    %32 = arith.negf %31 : vector<8x96xf32>
    %33 = math.exp %32 : vector<8x96xf32>
    %cst_14 = arith.constant 1.000000e+00 : f32
    %34 = vector.broadcast %cst_14 : f32 to vector<8x96xf32>
    %35 = arith.addf %34, %33 : vector<8x96xf32>
    %36 = arith.divf %34, %35 : vector<8x96xf32>
    %37 = vector.extract_strided_slice %36 {offsets = [0, 0], sizes = [8, 32], strides = [1, 1]} : vector<8x96xf32> to vector<8x32xf32>
    %38 = vector.extract_strided_slice %36 {offsets = [0, 32], sizes = [8, 32], strides = [1, 1]} : vector<8x96xf32> to vector<8x32xf32>
    %39 = vector.extract_strided_slice %36 {offsets = [0, 64], sizes = [8, 32], strides = [1, 1]} : vector<8x96xf32> to vector<8x32xf32>
    %40 = vector.extract_strided_slice %30 {offsets = [0, 96], sizes = [8, 32], strides = [1, 1]} : vector<8x128xf32> to vector<8x32xf32>
    %41 = math.tanh %40 : vector<8x32xf32>
    %42 = arith.mulf %38, %25 : vector<8x32xf32>
    %43 = arith.mulf %37, %41 : vector<8x32xf32>
    %44 = arith.addf %42, %43 : vector<8x32xf32>
    %45 = math.tanh %44 : vector<8x32xf32>
    %46 = arith.mulf %39, %45 : vector<8x32xf32>
    %47 = vector.extract_strided_slice %5 {offsets = [16, 0], sizes = [8, 128], strides = [1, 1]} : vector<64x128xf32> to vector<8x128xf32>
    %cst_15 = arith.constant dense<0.000000e+00> : vector<8x128xf32>
    %48 = tpu.matmul %46, %6, %cst_15 {dimension_numbers = #tpu.dot_dimension_numbers<[1], [0], [0], [1], [0, 0, 1, 1], [], []>} : vector<8x32xf32>, vector<32x128xf32>, vector<8x128xf32> -> vector<8x128xf32>
    %49 = arith.addf %47, %48 : vector<8x128xf32>
    %50 = vector.extract_strided_slice %49 {offsets = [0, 0], sizes = [8, 96], strides = [1, 1]} : vector<8x128xf32> to vector<8x96xf32>
    %51 = arith.negf %50 : vector<8x96xf32>
    %52 = math.exp %51 : vector<8x96xf32>
    %cst_16 = arith.constant 1.000000e+00 : f32
    %53 = vector.broadcast %cst_16 : f32 to vector<8x96xf32>
    %54 = arith.addf %53, %52 : vector<8x96xf32>
    %55 = arith.divf %53, %54 : vector<8x96xf32>
    %56 = vector.extract_strided_slice %55 {offsets = [0, 0], sizes = [8, 32], strides = [1, 1]} : vector<8x96xf32> to vector<8x32xf32>
    %57 = vector.extract_strided_slice %55 {offsets = [0, 32], sizes = [8, 32], strides = [1, 1]} : vector<8x96xf32> to vector<8x32xf32>
    %58 = vector.extract_strided_slice %55 {offsets = [0, 64], sizes = [8, 32], strides = [1, 1]} : vector<8x96xf32> to vector<8x32xf32>
    %59 = vector.extract_strided_slice %49 {offsets = [0, 96], sizes = [8, 32], strides = [1, 1]} : vector<8x128xf32> to vector<8x32xf32>
    %60 = math.tanh %59 : vector<8x32xf32>
    %61 = arith.mulf %57, %44 : vector<8x32xf32>
    %62 = arith.mulf %56, %60 : vector<8x32xf32>
    %63 = arith.addf %61, %62 : vector<8x32xf32>
    %64 = math.tanh %63 : vector<8x32xf32>
    %65 = arith.mulf %58, %64 : vector<8x32xf32>
    %66 = vector.extract_strided_slice %5 {offsets = [24, 0], sizes = [8, 128], strides = [1, 1]} : vector<64x128xf32> to vector<8x128xf32>
    %cst_17 = arith.constant dense<0.000000e+00> : vector<8x128xf32>
    %67 = tpu.matmul %65, %6, %cst_17 {dimension_numbers = #tpu.dot_dimension_numbers<[1], [0], [0], [1], [0, 0, 1, 1], [], []>} : vector<8x32xf32>, vector<32x128xf32>, vector<8x128xf32> -> vector<8x128xf32>
    %68 = arith.addf %66, %67 : vector<8x128xf32>
    %69 = vector.extract_strided_slice %68 {offsets = [0, 0], sizes = [8, 96], strides = [1, 1]} : vector<8x128xf32> to vector<8x96xf32>
    %70 = arith.negf %69 : vector<8x96xf32>
    %71 = math.exp %70 : vector<8x96xf32>
    %cst_18 = arith.constant 1.000000e+00 : f32
    %72 = vector.broadcast %cst_18 : f32 to vector<8x96xf32>
    %73 = arith.addf %72, %71 : vector<8x96xf32>
    %74 = arith.divf %72, %73 : vector<8x96xf32>
    %75 = vector.extract_strided_slice %74 {offsets = [0, 0], sizes = [8, 32], strides = [1, 1]} : vector<8x96xf32> to vector<8x32xf32>
    %76 = vector.extract_strided_slice %74 {offsets = [0, 32], sizes = [8, 32], strides = [1, 1]} : vector<8x96xf32> to vector<8x32xf32>
    %77 = vector.extract_strided_slice %74 {offsets = [0, 64], sizes = [8, 32], strides = [1, 1]} : vector<8x96xf32> to vector<8x32xf32>
    %78 = vector.extract_strided_slice %68 {offsets = [0, 96], sizes = [8, 32], strides = [1, 1]} : vector<8x128xf32> to vector<8x32xf32>
    %79 = math.tanh %78 : vector<8x32xf32>
    %80 = arith.mulf %76, %63 : vector<8x32xf32>
    %81 = arith.mulf %75, %79 : vector<8x32xf32>
    %82 = arith.addf %80, %81 : vector<8x32xf32>
    %83 = math.tanh %82 : vector<8x32xf32>
    %84 = arith.mulf %77, %83 : vector<8x32xf32>
    %85 = vector.extract_strided_slice %5 {offsets = [32, 0], sizes = [8, 128], strides = [1, 1]} : vector<64x128xf32> to vector<8x128xf32>
    %cst_19 = arith.constant dense<0.000000e+00> : vector<8x128xf32>
    %86 = tpu.matmul %84, %6, %cst_19 {dimension_numbers = #tpu.dot_dimension_numbers<[1], [0], [0], [1], [0, 0, 1, 1], [], []>} : vector<8x32xf32>, vector<32x128xf32>, vector<8x128xf32> -> vector<8x128xf32>
    %87 = arith.addf %85, %86 : vector<8x128xf32>
    %88 = vector.extract_strided_slice %87 {offsets = [0, 0], sizes = [8, 96], strides = [1, 1]} : vector<8x128xf32> to vector<8x96xf32>
    %89 = arith.negf %88 : vector<8x96xf32>
    %90 = math.exp %89 : vector<8x96xf32>
    %cst_20 = arith.constant 1.000000e+00 : f32
    %91 = vector.broadcast %cst_20 : f32 to vector<8x96xf32>
    %92 = arith.addf %91, %90 : vector<8x96xf32>
    %93 = arith.divf %91, %92 : vector<8x96xf32>
    %94 = vector.extract_strided_slice %93 {offsets = [0, 0], sizes = [8, 32], strides = [1, 1]} : vector<8x96xf32> to vector<8x32xf32>
    %95 = vector.extract_strided_slice %93 {offsets = [0, 32], sizes = [8, 32], strides = [1, 1]} : vector<8x96xf32> to vector<8x32xf32>
    %96 = vector.extract_strided_slice %93 {offsets = [0, 64], sizes = [8, 32], strides = [1, 1]} : vector<8x96xf32> to vector<8x32xf32>
    %97 = vector.extract_strided_slice %87 {offsets = [0, 96], sizes = [8, 32], strides = [1, 1]} : vector<8x128xf32> to vector<8x32xf32>
    %98 = math.tanh %97 : vector<8x32xf32>
    %99 = arith.mulf %95, %82 : vector<8x32xf32>
    %100 = arith.mulf %94, %98 : vector<8x32xf32>
    %101 = arith.addf %99, %100 : vector<8x32xf32>
    %102 = math.tanh %101 : vector<8x32xf32>
    %103 = arith.mulf %96, %102 : vector<8x32xf32>
    %104 = vector.extract_strided_slice %5 {offsets = [40, 0], sizes = [8, 128], strides = [1, 1]} : vector<64x128xf32> to vector<8x128xf32>
    %cst_21 = arith.constant dense<0.000000e+00> : vector<8x128xf32>
    %105 = tpu.matmul %103, %6, %cst_21 {dimension_numbers = #tpu.dot_dimension_numbers<[1], [0], [0], [1], [0, 0, 1, 1], [], []>} : vector<8x32xf32>, vector<32x128xf32>, vector<8x128xf32> -> vector<8x128xf32>
    %106 = arith.addf %104, %105 : vector<8x128xf32>
    %107 = vector.extract_strided_slice %106 {offsets = [0, 0], sizes = [8, 96], strides = [1, 1]} : vector<8x128xf32> to vector<8x96xf32>
    %108 = arith.negf %107 : vector<8x96xf32>
    %109 = math.exp %108 : vector<8x96xf32>
    %cst_22 = arith.constant 1.000000e+00 : f32
    %110 = vector.broadcast %cst_22 : f32 to vector<8x96xf32>
    %111 = arith.addf %110, %109 : vector<8x96xf32>
    %112 = arith.divf %110, %111 : vector<8x96xf32>
    %113 = vector.extract_strided_slice %112 {offsets = [0, 0], sizes = [8, 32], strides = [1, 1]} : vector<8x96xf32> to vector<8x32xf32>
    %114 = vector.extract_strided_slice %112 {offsets = [0, 32], sizes = [8, 32], strides = [1, 1]} : vector<8x96xf32> to vector<8x32xf32>
    %115 = vector.extract_strided_slice %112 {offsets = [0, 64], sizes = [8, 32], strides = [1, 1]} : vector<8x96xf32> to vector<8x32xf32>
    %116 = vector.extract_strided_slice %106 {offsets = [0, 96], sizes = [8, 32], strides = [1, 1]} : vector<8x128xf32> to vector<8x32xf32>
    %117 = math.tanh %116 : vector<8x32xf32>
    %118 = arith.mulf %114, %101 : vector<8x32xf32>
    %119 = arith.mulf %113, %117 : vector<8x32xf32>
    %120 = arith.addf %118, %119 : vector<8x32xf32>
    %121 = math.tanh %120 : vector<8x32xf32>
    %122 = arith.mulf %115, %121 : vector<8x32xf32>
    %123 = vector.extract_strided_slice %5 {offsets = [48, 0], sizes = [8, 128], strides = [1, 1]} : vector<64x128xf32> to vector<8x128xf32>
    %cst_23 = arith.constant dense<0.000000e+00> : vector<8x128xf32>
    %124 = tpu.matmul %122, %6, %cst_23 {dimension_numbers = #tpu.dot_dimension_numbers<[1], [0], [0], [1], [0, 0, 1, 1], [], []>} : vector<8x32xf32>, vector<32x128xf32>, vector<8x128xf32> -> vector<8x128xf32>
    %125 = arith.addf %123, %124 : vector<8x128xf32>
    %126 = vector.extract_strided_slice %125 {offsets = [0, 0], sizes = [8, 96], strides = [1, 1]} : vector<8x128xf32> to vector<8x96xf32>
    %127 = arith.negf %126 : vector<8x96xf32>
    %128 = math.exp %127 : vector<8x96xf32>
    %cst_24 = arith.constant 1.000000e+00 : f32
    %129 = vector.broadcast %cst_24 : f32 to vector<8x96xf32>
    %130 = arith.addf %129, %128 : vector<8x96xf32>
    %131 = arith.divf %129, %130 : vector<8x96xf32>
    %132 = vector.extract_strided_slice %131 {offsets = [0, 0], sizes = [8, 32], strides = [1, 1]} : vector<8x96xf32> to vector<8x32xf32>
    %133 = vector.extract_strided_slice %131 {offsets = [0, 32], sizes = [8, 32], strides = [1, 1]} : vector<8x96xf32> to vector<8x32xf32>
    %134 = vector.extract_strided_slice %131 {offsets = [0, 64], sizes = [8, 32], strides = [1, 1]} : vector<8x96xf32> to vector<8x32xf32>
    %135 = vector.extract_strided_slice %125 {offsets = [0, 96], sizes = [8, 32], strides = [1, 1]} : vector<8x128xf32> to vector<8x32xf32>
    %136 = math.tanh %135 : vector<8x32xf32>
    %137 = arith.mulf %133, %120 : vector<8x32xf32>
    %138 = arith.mulf %132, %136 : vector<8x32xf32>
    %139 = arith.addf %137, %138 : vector<8x32xf32>
    %140 = math.tanh %139 : vector<8x32xf32>
    %141 = arith.mulf %134, %140 : vector<8x32xf32>
    %142 = vector.extract_strided_slice %5 {offsets = [56, 0], sizes = [8, 128], strides = [1, 1]} : vector<64x128xf32> to vector<8x128xf32>
    %cst_25 = arith.constant dense<0.000000e+00> : vector<8x128xf32>
    %143 = tpu.matmul %141, %6, %cst_25 {dimension_numbers = #tpu.dot_dimension_numbers<[1], [0], [0], [1], [0, 0, 1, 1], [], []>} : vector<8x32xf32>, vector<32x128xf32>, vector<8x128xf32> -> vector<8x128xf32>
    %144 = arith.addf %142, %143 : vector<8x128xf32>
    %145 = vector.extract_strided_slice %144 {offsets = [0, 0], sizes = [8, 96], strides = [1, 1]} : vector<8x128xf32> to vector<8x96xf32>
    %146 = arith.negf %145 : vector<8x96xf32>
    %147 = math.exp %146 : vector<8x96xf32>
    %cst_26 = arith.constant 1.000000e+00 : f32
    %148 = vector.broadcast %cst_26 : f32 to vector<8x96xf32>
    %149 = arith.addf %148, %147 : vector<8x96xf32>
    %150 = arith.divf %148, %149 : vector<8x96xf32>
    %151 = vector.extract_strided_slice %150 {offsets = [0, 0], sizes = [8, 32], strides = [1, 1]} : vector<8x96xf32> to vector<8x32xf32>
    %152 = vector.extract_strided_slice %150 {offsets = [0, 32], sizes = [8, 32], strides = [1, 1]} : vector<8x96xf32> to vector<8x32xf32>
    %153 = vector.extract_strided_slice %150 {offsets = [0, 64], sizes = [8, 32], strides = [1, 1]} : vector<8x96xf32> to vector<8x32xf32>
    %154 = vector.extract_strided_slice %144 {offsets = [0, 96], sizes = [8, 32], strides = [1, 1]} : vector<8x128xf32> to vector<8x32xf32>
    %155 = math.tanh %154 : vector<8x32xf32>
    %156 = arith.mulf %152, %139 : vector<8x32xf32>
    %157 = arith.mulf %151, %155 : vector<8x32xf32>
    %158 = arith.addf %156, %157 : vector<8x32xf32>
    %159 = math.tanh %158 : vector<8x32xf32>
    %160 = arith.mulf %153, %159 : vector<8x32xf32>
    %161 = tpu.concatenate %27, %46, %65, %84, %103, %122, %141, %160 in 0 : vector<8x32xf32>, vector<8x32xf32>, vector<8x32xf32>, vector<8x32xf32>, vector<8x32xf32>, vector<8x32xf32>, vector<8x32xf32>, vector<8x32xf32> -> vector<64x32xf32>
    %c0_27 = arith.constant 0 : index
    %c0_28 = arith.constant 0 : index
    %162 = vector.load %arg7[%c0_27, %c0_28] : memref<32x128xf32, #tpu.memory_space<vmem>>, vector<32x128xf32>
    %cst_29 = arith.constant dense<0.000000e+00> : vector<64x128xf32>
    %163 = tpu.matmul %161, %162, %cst_29 {dimension_numbers = #tpu.dot_dimension_numbers<[1], [0], [0], [1], [0, 0, 1, 1], [], []>} : vector<64x32xf32>, vector<32x128xf32>, vector<64x128xf32> -> vector<64x128xf32>
    %c0_30 = arith.constant 0 : index
    %c0_31 = arith.constant 0 : index
    %164 = vector.load %arg8[%c0_30, %c0_31] : memref<1x128xf32, #tpu.memory_space<vmem>>, vector<1x128xf32>
    %165 = vector.broadcast %164 : vector<1x128xf32> to vector<64x128xf32>
    %166 = arith.addf %163, %165 : vector<64x128xf32>
    %c0_32 = arith.constant 0 : index
    %c0_33 = arith.constant 0 : index
    %167 = vector.load %arg9[%c0_32, %c0_33] : memref<64x128xf32, #tpu.memory_space<vmem>>, vector<64x128xf32>
    tpu.vector_store %arg9[%c0_32, %c0_33], %166 {strides = array<i32>} : memref<64x128xf32, #tpu.memory_space<vmem>>, vector<64x128xf32>,
    %cst_34 = arith.constant 0.000000e+00 : f32
    %168 = vector.broadcast %cst_34 : f32 to vector<8x64xf32>
    %169 = tpu.concatenate %160, %158, %168 in 1 : vector<8x32xf32>, vector<8x32xf32>, vector<8x64xf32> -> vector<8x128xf32>
    %c0_35 = arith.constant 0 : index
    %c0_36 = arith.constant 0 : index
    %170 = vector.load %arg10[%c0_35, %c0_36] : memref<8x128xf32, #tpu.memory_space<vmem>>, vector<8x128xf32>
    tpu.vector_store %arg10[%c0_35, %c0_36], %169 {strides = array<i32>} : memref<8x128xf32, #tpu.memory_space<vmem>>, vector<8x128xf32>,
    return
  }
  func.func @transform_0(%arg0: i32) -> (i32, i32) {
    %c0_i32 = arith.constant 0 : i32
    %c0_i32_0 = arith.constant 0 : i32
    %c0_i32_1 = arith.constant 0 : i32
    return %c0_i32, %c0_i32_0 : i32, i32
  }
  func.func @transform_1(%arg0: i32) -> (i32, i32) {
    %c0_i32 = arith.constant 0 : i32
    %c0_i32_0 = arith.constant 0 : i32
    %c0_i32_1 = arith.constant 0 : i32
    return %c0_i32, %c0_i32_0 : i32, i32
  }
  func.func @transform_2(%arg0: i32) -> (i32, i32) {
    %c0_i32 = arith.constant 0 : i32
    %c0_i32_0 = arith.constant 0 : i32
    %c0_i32_1 = arith.constant 0 : i32
    return %c0_i32, %c0_i32_0 : i32, i32
  }
  func.func @transform_3(%arg0: i32) -> (i32, i32) {
    %c0_i32 = arith.constant 0 : i32
    %c0_i32_0 = arith.constant 0 : i32
    %c0_i32_1 = arith.constant 0 : i32
    return %c0_i32, %c0_i32_0 : i32, i32
  }
  func.func @transform_4(%arg0: i32) -> (i32, i32) {
    %c0_i32 = arith.constant 0 : i32
    %c0_i32_0 = arith.constant 0 : i32
    %c0_i32_1 = arith.constant 0 : i32
    return %c0_i32, %c0_i32_0 : i32, i32
  }
  func.func @transform_5(%arg0: i32) -> (i32, i32) {
    %c0_i32 = arith.constant 0 : i32
    %c0_i32_0 = arith.constant 0 : i32
    %c0_i32_1 = arith.constant 0 : i32
    return %c0_i32, %c0_i32_0 : i32, i32
  }
  func.func @transform_6(%arg0: i32) -> (i32, i32) {
    %c0_i32 = arith.constant 0 : i32
    %c0_i32_0 = arith.constant 0 : i32
    %c0_i32_1 = arith.constant 0 : i32
    return %c0_i32, %c0_i32_0 : i32, i32
  }
  func.func @transform_7(%arg0: i32) -> (i32, i32) {
    %c0_i32 = arith.constant 0 : i32
    %c0_i32_0 = arith.constant 0 : i32
    %c0_i32_1 = arith.constant 0 : i32
    return %c0_i32, %c0_i32_0 : i32, i32
  }
  func.func @transform_8(%arg0: i32) -> (i32, i32) {
    %c0_i32 = arith.constant 0 : i32
    %c0_i32_0 = arith.constant 0 : i32
    %c0_i32_1 = arith.constant 0 : i32
    return %c0_i32, %c0_i32_0 : i32, i32
  }
  func.func @transform_9(%arg0: i32) -> (i32, i32) {
    %c0_i32 = arith.constant 0 : i32
    %c0_i32_0 = arith.constant 0 : i32
    %c0_i32_1 = arith.constant 0 : i32
    return %c0_i32, %c0_i32_0 : i32, i32
  }
}

</mosaic_0001>

<llo_original>
// kernel: prednet_forward.1
$region0: #{prednet_forward.1}
  #allocation0 [shape = 'u32[]', space=smem, size = 0x4, offset = 0x4, fixed_abs, tag = 'smem constant byte address 0x4 - core index']
  #allocation1 [shape = 'u32[72,128]{1,0:T(1,128)}', space=vmem, size = 0x9000, scoped, tag = 'internal scratch']
  %s0 = inlined_call_operand.vmem [shape: f32[64,16], index: 0, kind: input, shape index: {}]
  %s1 = inlined_call_operand.vmem [shape: f32[8,32], index: 1, kind: input, shape index: {}]
  %s2 = inlined_call_operand.vmem [shape: f32[8,32], index: 2, kind: input, shape index: {}]
  %s3 = inlined_call_operand.vmem [shape: f32[16,128], index: 3, kind: input, shape index: {}]
  %s4 = inlined_call_operand.vmem [shape: f32[32,128], index: 4, kind: input, shape index: {}]
  %s5 = inlined_call_operand.vmem [shape: f32[1,128], index: 5, kind: input, shape index: {}]
  %s6 = inlined_call_operand.vmem [shape: f32[32,128], index: 6, kind: input, shape index: {}]
  %s7 = inlined_call_operand.vmem [shape: f32[1,128], index: 7, kind: input, shape index: {}]
  %s8 = inlined_call_operand.vmem [shape: f32[64,128], index: 8, kind: output, shape index: {0}]
  %s9 = inlined_call_operand.vmem [shape: f32[8,128], index: 9, kind: output, shape index: {1}]
  %10 = xla_tuple %s8, %s9
  %s11 = sld [smem:[#allocation0]]
  $region50: #{prednet_forward.1} parent=0
    _
  %s13 = ssub.s32 1, %s11
  %s14 = scalar_select 0, %s13, %s11
  // Predicated region
  $region2: #{prednet_forward.1} parent=0 // pred_check
    _
  $region3: #{prednet_forward.1} parent=0 // pred_check_branch
    %16 = sbr.rel (0) target = $region5
  $region4: #{prednet_forward.1} parent=0 // pred_region
    _
  $region5: #{prednet_forward.1} parent=0 // pred_fallthru
    _
  // Predicated region
  $region6: #{prednet_forward.1} parent=0 // pred_check
    _
  $region7: #{prednet_forward.1} parent=0 // pred_check_branch
    %18 = sbr.rel (0) target = $region9
  $region8: #{prednet_forward.1} parent=0 // pred_region
    _
  $region9: #{prednet_forward.1} parent=0 // pred_fallthru
    _
  // Predicated region
  $region10: #{prednet_forward.1} parent=0 // pred_check
    _
  $region11: #{prednet_forward.1} parent=0 // pred_check_branch
    %20 = sbr.rel (0) target = $region13
  $region12: #{prednet_forward.1} parent=0 // pred_region
    _
  $region13: #{prednet_forward.1} parent=0 // pred_fallthru
    _
  // Predicated region
  $region14: #{prednet_forward.1} parent=0 // pred_check
    _
  $region15: #{prednet_forward.1} parent=0 // pred_check_branch
    %22 = sbr.rel (0) target = $region17
  $region16: #{prednet_forward.1} parent=0 // pred_region
    _
  $region17: #{prednet_forward.1} parent=0 // pred_fallthru
    _
  // Predicated region
  $region18: #{prednet_forward.1} parent=0 // pred_check
    _
  $region19: #{prednet_forward.1} parent=0 // pred_check_branch
    %24 = sbr.rel (0) target = $region21
  $region20: #{prednet_forward.1} parent=0 // pred_region
    _
  $region21: #{prednet_forward.1} parent=0 // pred_fallthru
    _
  // Predicated region
  $region22: #{prednet_forward.1} parent=0 // pred_check
    _
  $region23: #{prednet_forward.1} parent=0 // pred_check_branch
    %26 = sbr.rel (0) target = $region25
  $region24: #{prednet_forward.1} parent=0 // pred_region
    _
  $region25: #{prednet_forward.1} parent=0 // pred_fallthru
    _
  // Predicated region
  $region26: #{prednet_forward.1} parent=0 // pred_check
    _
  $region27: #{prednet_forward.1} parent=0 // pred_check_branch
    %28 = sbr.rel (0) target = $region29
  $region28: #{prednet_forward.1} parent=0 // pred_region
    _
  $region29: #{prednet_forward.1} parent=0 // pred_fallthru
    _
  // Predicated region
  $region30: #{prednet_forward.1} parent=0 // pred_check
    _
  $region31: #{prednet_forward.1} parent=0 // pred_check_branch
    %30 = sbr.rel (0) target = $region33
  $region32: #{prednet_forward.1} parent=0 // pred_region
    _
  $region33: #{prednet_forward.1} parent=0 // pred_fallthru
    _
  %v31 = vld [vmem:[%s0] sm:$0xff]
  %v32 = vld [vmem:[%s0 + $0x8] sm:$0xff]
  %v33 = vld [vmem:[%s0 + $0x10] sm:$0xff]
  %v34 = vld [vmem:[%s0 + $0x18] sm:$0xff]
  %v35 = vld [vmem:[%s0 + $0x20] sm:$0xff]
  %v36 = vld [vmem:[%s0 + $0x28] sm:$0xff]
  %v37 = vld [vmem:[%s0 + $0x30] sm:$0xff]
  %v38 = vld [vmem:[%s0 + $0x38] sm:$0xff]
  %v39 = vld [vmem:[%s3] sm:$0xff]
  %v40 = vld [vmem:[%s3 + $0x8] sm:$0xff]
  %v41 = vld [vmem:[%s5] sm:$0x1]
  %v43 = vperm.slane %v41, 0
  %vm45 = vcmask 130048
  %v47 = vsel %vm45, %v31, 0
  %v50 = vsel %vm45, %v32, 0
  %v53 = vsel %vm45, %v33, 0
  %v56 = vsel %vm45, %v34, 0
  %v59 = vsel %vm45, %v35, 0
  %v62 = vsel %vm45, %v36, 0
  %v65 = vsel %vm45, %v37, 0
  %v68 = vsel %vm45, %v38, 0
  %70 = vmatpush.msra.mxu0 0.0
  %71 = vmatpush.msra.mxu0 0.0
  %72 = vmatpush.msra.mxu0 0.0
  %73 = vmatpush.msra.mxu0 0.0
  %74 = vmatpush.msra.mxu0 0.0
  %75 = vmatpush.msra.mxu0 0.0
  %76 = vmatpush.msra.mxu0 0.0
  %77 = vmatpush.msra.mxu0 0.0
  %78 = vmatpush.msra.mxu0 0.0
  %79 = vmatpush.msra.mxu0 0.0
  %80 = vmatpush.msra.mxu0 0.0
  %81 = vmatpush.msra.mxu0 0.0
  %82 = vmatpush.msra.mxu0 0.0
  %83 = vmatpush.msra.mxu0 0.0
  %84 = vmatpush.msra.mxu0 %v40
  %85 = vmatpush.msra.mxu0 %v39
  %86 = vmatmul.f32.gmra.mxu0 %v47
  %v87 = vpop.f32.mrf.mxu0
  %v88 = vadd.f32 %v43, %v87
  %89 = vmatmul.f32.gmra.mxu0 %v50
  %v90 = vpop.f32.mrf.mxu0
  %v91 = vadd.f32 %v43, %v90
  %92 = vmatmul.f32.gmra.mxu0 %v53
  %v93 = vpop.f32.mrf.mxu0
  %v94 = vadd.f32 %v43, %v93
  %95 = vmatmul.f32.gmra.mxu0 %v56
  %v96 = vpop.f32.mrf.mxu0
  %v97 = vadd.f32 %v43, %v96
  %98 = vmatmul.f32.gmra.mxu0 %v59
  %v99 = vpop.f32.mrf.mxu0
  %v100 = vadd.f32 %v43, %v99
  %101 = vmatmul.f32.gmra.mxu0 %v62
  %v102 = vpop.f32.mrf.mxu0
  %v103 = vadd.f32 %v43, %v102
  %104 = vmatmul.f32.gmra.mxu0 %v65
  %v105 = vpop.f32.mrf.mxu0
  %v106 = vadd.f32 %v43, %v105
  %107 = vmatmul.f32.gmra.mxu0 %v68
  %v108 = vpop.f32.mrf.mxu0
  %v109 = vadd.f32 %v43, %v108
  %110 = vdwg.mxu0
  %v111 = vld [vmem:[%s4] sm:$0xff]
  %v112 = vld [vmem:[%s4 + $0x8] sm:$0xff]
  %v113 = vld [vmem:[%s4 + $0x10] sm:$0xff]
  %v114 = vld [vmem:[%s4 + $0x18] sm:$0xff]
  %v115 = vld [vmem:[%s1] sm:$0xff]
  %v116 = vld [vmem:[%s2] sm:$0xff]
  %vm117 = vcmask 261120
  %v119 = vsel %vm117, %v115, 0
  %121 = vmatpush.msra.mxu0 0.0
  %122 = vmatpush.msra.mxu0 0.0
  %123 = vmatpush.msra.mxu0 0.0
  %124 = vmatpush.msra.mxu0 0.0
  %125 = vmatpush.msra.mxu0 0.0
  %126 = vmatpush.msra.mxu0 0.0
  %127 = vmatpush.msra.mxu0 0.0
  %128 = vmatpush.msra.mxu0 0.0
  %129 = vmatpush.msra.mxu0 0.0
  %130 = vmatpush.msra.mxu0 0.0
  %131 = vmatpush.msra.mxu0 0.0
  %132 = vmatpush.msra.mxu0 0.0
  %133 = vmatpush.msra.mxu0 %v114
  %134 = vmatpush.msra.mxu0 %v113
  %135 = vmatpush.msra.mxu0 %v112
  %136 = vmatpush.msra.mxu0 %v111
  %137 = vmatmul.f32.gmra.mxu0 %v119
  %v138 = vpop.f32.mrf.mxu0
  %v139 = vadd.f32 0.0, %v138
  %140 = vdwg.mxu0
  %v141 = vadd.f32 %v88, %v139
  %v142 = vxor.u32 %v141, 2147483648
  %v143 = vmul.f32 %v142, 1.442695
  %v144 = vpow.pop %v143
  %v145 = vadd.f32 %v144, 1.0
  %v146 = vrcp.pop %v145
  %v147 = vmul.f32 %v145, %v146
  %v148 = vsub.f32 1.0, %v147
  %v149 = vmul.f32 %v146, %v148
  %v150 = vadd.f32 %v146, %v149
  %vm151 = vweird.f32 %v145
  %vm152 = vweird.f32 %v146
  %vm153 = vmor %vm151, %vm152
  %v154 = vsel %vm153, %v146, %v150
  %v155 = vand.u32 2147483647, %v145
  %vm156 = vcmp.eq.f32.partialorder %v155, 8.507059e+37
  %v157 = vand.u32 %v145, 2147483648
  %v158 = vor.u32 1.1754944e-38, %v157
  %v159 = vsel %vm156, %v158, %v154
  %v160 = vmul.f32 1.0, %v159
  %v161 = vtanh.pop %v141
  %163 = vrot.lane.b32.xlu0 %v116, 32
  %v164 = vpop.permute.xlu0 %163
  %v166 = vmul.f32 %v160, %v164
  %168 = vrot.lane.b32.xlu0 %v161, 32
  %v169 = vpop.permute.xlu0 %168
  %v171 = vmul.f32 %v160, %v169
  %173 = vrot.lane.b32.xlu0 %v171, 32
  %v174 = vpop.permute.xlu0 %173
  %v176 = vadd.f32 %v166, %v174
  %v177 = vtanh.pop %v176
  %179 = vrot.lane.b32.xlu0 %v177, 32
  %v180 = vpop.permute.xlu0 %179
  %v182 = vmul.f32 %v160, %v180
  %184 = vrot.lane.b32.xlu0 %v182, 64
  %v185 = vpop.permute.xlu0 %184
  %v186 = vsel %vm117, %v185, 0
  %188 = vmatpush.msra.mxu0 0.0
  %189 = vmatpush.msra.mxu0 0.0
  %190 = vmatpush.msra.mxu0 0.0
  %191 = vmatpush.msra.mxu0 0.0
  %192 = vmatpush.msra.mxu0 0.0
  %193 = vmatpush.msra.mxu0 0.0
  %194 = vmatpush.msra.mxu0 0.0
  %195 = vmatpush.msra.mxu0 0.0
  %196 = vmatpush.msra.mxu0 0.0
  %197 = vmatpush.msra.mxu0 0.0
  %198 = vmatpush.msra.mxu0 0.0
  %199 = vmatpush.msra.mxu0 0.0
  %200 = vmatpush.msra.mxu0 %v114
  %201 = vmatpush.msra.mxu0 %v113
  %202 = vmatpush.msra.mxu0 %v112
  %203 = vmatpush.msra.mxu0 %v111
  %204 = vmatmul.f32.gmra.mxu0 %v186
  %v205 = vpop.f32.mrf.mxu0
  %v206 = vadd.f32 0.0, %v205
  %207 = vdwg.mxu0
  %v208 = vadd.f32 %v91, %v206
  %v209 = vxor.u32 %v208, 2147483648
  %v210 = vmul.f32 %v209, 1.442695
  %v211 = vpow.pop %v210
  %v212 = vadd.f32 %v211, 1.0
  %v213 = vrcp.pop %v212
  %v214 = vmul.f32 %v212, %v213
  %v215 = vsub.f32 1.0, %v214
  %v216 = vmul.f32 %v213, %v215
  %v217 = vadd.f32 %v213, %v216
  %vm218 = vweird.f32 %v212
  %vm219 = vweird.f32 %v213
  %vm220 = vmor %vm218, %vm219
  %v221 = vsel %vm220, %v213, %v217
  %v222 = vand.u32 2147483647, %v212
  %vm223 = vcmp.eq.f32.partialorder %v222, 8.507059e+37
  %v224 = vand.u32 %v212, 2147483648
  %v225 = vor.u32 1.1754944e-38, %v224
  %v226 = vsel %vm223, %v225, %v221
  %v227 = vmul.f32 1.0, %v226
  %v228 = vtanh.pop %v208
  %v229 = vmul.f32 %v227, %v176
  %231 = vrot.lane.b32.xlu0 %v228, 32
  %v232 = vpop.permute.xlu0 %231
  %v234 = vmul.f32 %v227, %v232
  %236 = vrot.lane.b32.xlu0 %v234, 32
  %v237 = vpop.permute.xlu0 %236
  %v239 = vadd.f32 %v229, %v237
  %v240 = vtanh.pop %v239
  %242 = vrot.lane.b32.xlu0 %v240, 32
  %v243 = vpop.permute.xlu0 %242
  %v245 = vmul.f32 %v227, %v243
  %247 = vrot.lane.b32.xlu0 %v245, 64
  %v248 = vpop.permute.xlu0 %247
  %v249 = vsel %vm117, %v248, 0
  %251 = vmatpush.msra.mxu0 0.0
  %252 = vmatpush.msra.mxu0 0.0
  %253 = vmatpush.msra.mxu0 0.0
  %254 = vmatpush.msra.mxu0 0.0
  %255 = vmatpush.msra.mxu0 0.0
  %256 = vmatpush.msra.mxu0 0.0
  %257 = vmatpush.msra.mxu0 0.0
  %258 = vmatpush.msra.mxu0 0.0
  %259 = vmatpush.msra.mxu0 0.0
  %260 = vmatpush.msra.mxu0 0.0
  %261 = vmatpush.msra.mxu0 0.0
  %262 = vmatpush.msra.mxu0 0.0
  %263 = vmatpush.msra.mxu0 %v114
  %264 = vmatpush.msra.mxu0 %v113
  %265 = vmatpush.msra.mxu0 %v112
  %266 = vmatpush.msra.mxu0 %v111
  %267 = vmatmul.f32.gmra.mxu0 %v249
  %v268 = vpop.f32.mrf.mxu0
  %v269 = vadd.f32 0.0, %v268
  %270 = vdwg.mxu0
  %v271 = vadd.f32 %v94, %v269
  %v272 = vxor.u32 %v271, 2147483648
  %v273 = vmul.f32 %v272, 1.442695
  %v274 = vpow.pop %v273
  %v275 = vadd.f32 %v274, 1.0
  %v276 = vrcp.pop %v275
  %v277 = vmul.f32 %v275, %v276
  %v278 = vsub.f32 1.0, %v277
  %v279 = vmul.f32 %v276, %v278
  %v280 = vadd.f32 %v276, %v279
  %vm281 = vweird.f32 %v275
  %vm282 = vweird.f32 %v276
  %vm283 = vmor %vm281, %vm282
  %v284 = vsel %vm283, %v276, %v280
  %v285 = vand.u32 2147483647, %v275
  %vm286 = vcmp.eq.f32.partialorder %v285, 8.507059e+37
  %v287 = vand.u32 %v275, 2147483648
  %v288 = vor.u32 1.1754944e-38, %v287
  %v289 = vsel %vm286, %v288, %v284
  %v290 = vmul.f32 1.0, %v289
  %v291 = vtanh.pop %v271
  %v292 = vmul.f32 %v290, %v239
  %294 = vrot.lane.b32.xlu0 %v291, 32
  %v295 = vpop.permute.xlu0 %294
  %v297 = vmul.f32 %v290, %v295
  %299 = vrot.lane.b32.xlu0 %v297, 32
  %v300 = vpop.permute.xlu0 %299
  %v302 = vadd.f32 %v292, %v300
  %v303 = vtanh.pop %v302
  %305 = vrot.lane.b32.xlu0 %v303, 32
  %v306 = vpop.permute.xlu0 %305
  %v308 = vmul.f32 %v290, %v306
  %310 = vrot.lane.b32.xlu0 %v308, 64
  %v311 = vpop.permute.xlu0 %310
  %v312 = vsel %vm117, %v311, 0
  %314 = vmatpush.msra.mxu0 0.0
  %315 = vmatpush.msra.mxu0 0.0
  %316 = vmatpush.msra.mxu0 0.0
  %317 = vmatpush.msra.mxu0 0.0
  %318 = vmatpush.msra.mxu0 0.0
  %319 = vmatpush.msra.mxu0 0.0
  %320 = vmatpush.msra.mxu0 0.0
  %321 = vmatpush.msra.mxu0 0.0
  %322 = vmatpush.msra.mxu0 0.0
  %323 = vmatpush.msra.mxu0 0.0
  %324 = vmatpush.msra.mxu0 0.0
  %325 = vmatpush.msra.mxu0 0.0
  %326 = vmatpush.msra.mxu0 %v114
  %327 = vmatpush.msra.mxu0 %v113
  %328 = vmatpush.msra.mxu0 %v112
  %329 = vmatpush.msra.mxu0 %v111
  %330 = vmatmul.f32.gmra.mxu0 %v312
  %v331 = vpop.f32.mrf.mxu0
  %v332 = vadd.f32 0.0, %v331
  %333 = vdwg.mxu0
  %v334 = vadd.f32 %v97, %v332
  %v335 = vxor.u32 %v334, 2147483648
  %v336 = vmul.f32 %v335, 1.442695
  %v337 = vpow.pop %v336
  %v338 = vadd.f32 %v337, 1.0
  %v339 = vrcp.pop %v338
  %v340 = vmul.f32 %v338, %v339
  %v341 = vsub.f32 1.0, %v340
  %v342 = vmul.f32 %v339, %v341
  %v343 = vadd.f32 %v339, %v342
  %vm344 = vweird.f32 %v338
  %vm345 = vweird.f32 %v339
  %vm346 = vmor %vm344, %vm345
  %v347 = vsel %vm346, %v339, %v343
  %v348 = vand.u32 2147483647, %v338
  %vm349 = vcmp.eq.f32.partialorder %v348, 8.507059e+37
  %v350 = vand.u32 %v338, 2147483648
  %v351 = vor.u32 1.1754944e-38, %v350
  %v352 = vsel %vm349, %v351, %v347
  %v353 = vmul.f32 1.0, %v352
  %v354 = vtanh.pop %v334
  %v355 = vmul.f32 %v353, %v302
  %357 = vrot.lane.b32.xlu0 %v354, 32
  %v358 = vpop.permute.xlu0 %357
  %v360 = vmul.f32 %v353, %v358
  %362 = vrot.lane.b32.xlu0 %v360, 32
  %v363 = vpop.permute.xlu0 %362
  %v365 = vadd.f32 %v355, %v363
  %v366 = vtanh.pop %v365
  %368 = vrot.lane.b32.xlu0 %v366, 32
  %v369 = vpop.permute.xlu0 %368
  %v371 = vmul.f32 %v353, %v369
  %373 = vrot.lane.b32.xlu0 %v371, 64
  %v374 = vpop.permute.xlu0 %373
  %v375 = vsel %vm117, %v374, 0
  %377 = vmatpush.msra.mxu0 0.0
  %378 = vmatpush.msra.mxu0 0.0
  %379 = vmatpush.msra.mxu0 0.0
  %380 = vmatpush.msra.mxu0 0.0
  %381 = vmatpush.msra.mxu0 0.0
  %382 = vmatpush.msra.mxu0 0.0
  %383 = vmatpush.msra.mxu0 0.0
  %384 = vmatpush.msra.mxu0 0.0
  %385 = vmatpush.msra.mxu0 0.0
  %386 = vmatpush.msra.mxu0 0.0
  %387 = vmatpush.msra.mxu0 0.0
  %388 = vmatpush.msra.mxu0 0.0
  %389 = vmatpush.msra.mxu0 %v114
  %390 = vmatpush.msra.mxu0 %v113
  %391 = vmatpush.msra.mxu0 %v112
  %392 = vmatpush.msra.mxu0 %v111
  %393 = vmatmul.f32.gmra.mxu0 %v375
  %v394 = vpop.f32.mrf.mxu0
  %v395 = vadd.f32 0.0, %v394
  %396 = vdwg.mxu0
  %v397 = vadd.f32 %v100, %v395
  %v398 = vxor.u32 %v397, 2147483648
  %v399 = vmul.f32 %v398, 1.442695
  %v400 = vpow.pop %v399
  %v401 = vadd.f32 %v400, 1.0
  %v402 = vrcp.pop %v401
  %v403 = vmul.f32 %v401, %v402
  %v404 = vsub.f32 1.0, %v403
  %v405 = vmul.f32 %v402, %v404
  %v406 = vadd.f32 %v402, %v405
  %vm407 = vweird.f32 %v401
  %vm408 = vweird.f32 %v402
  %vm409 = vmor %vm407, %vm408
  %v410 = vsel %vm409, %v402, %v406
  %v411 = vand.u32 2147483647, %v401
  %vm412 = vcmp.eq.f32.partialorder %v411, 8.507059e+37
  %v413 = vand.u32 %v401, 2147483648
  %v414 = vor.u32 1.1754944e-38, %v413
  %v415 = vsel %vm412, %v414, %v410
  %v416 = vmul.f32 1.0, %v415
  %v417 = vtanh.pop %v397
  %v418 = vmul.f32 %v416, %v365
  %420 = vrot.lane.b32.xlu0 %v417, 32
  %v421 = vpop.permute.xlu0 %420
  %v423 = vmul.f32 %v416, %v421
  %425 = vrot.lane.b32.xlu0 %v423, 32
  %v426 = vpop.permute.xlu0 %425
  %v428 = vadd.f32 %v418, %v426
  %v429 = vtanh.pop %v428
  %431 = vrot.lane.b32.xlu0 %v429, 32
  %v432 = vpop.permute.xlu0 %431
  %v434 = vmul.f32 %v416, %v432
  %436 = vrot.lane.b32.xlu0 %v434, 64
  %v437 = vpop.permute.xlu0 %436
  %v438 = vsel %vm117, %v437, 0
  %440 = vmatpush.msra.mxu0 0.0
  %441 = vmatpush.msra.mxu0 0.0
  %442 = vmatpush.msra.mxu0 0.0
  %443 = vmatpush.msra.mxu0 0.0
  %444 = vmatpush.msra.mxu0 0.0
  %445 = vmatpush.msra.mxu0 0.0
  %446 = vmatpush.msra.mxu0 0.0
  %447 = vmatpush.msra.mxu0 0.0
  %448 = vmatpush.msra.mxu0 0.0
  %449 = vmatpush.msra.mxu0 0.0
  %450 = vmatpush.msra.mxu0 0.0
  %451 = vmatpush.msra.mxu0 0.0
  %452 = vmatpush.msra.mxu0 %v114
  %453 = vmatpush.msra.mxu0 %v113
  %454 = vmatpush.msra.mxu0 %v112
  %455 = vmatpush.msra.mxu0 %v111
  %456 = vmatmul.f32.gmra.mxu0 %v438
  %v457 = vpop.f32.mrf.mxu0
  %v458 = vadd.f32 0.0, %v457
  %459 = vdwg.mxu0
  %v460 = vadd.f32 %v103, %v458
  %v461 = vxor.u32 %v460, 2147483648
  %v462 = vmul.f32 %v461, 1.442695
  %v463 = vpow.pop %v462
  %v464 = vadd.f32 %v463, 1.0
  %v465 = vrcp.pop %v464
  %v466 = vmul.f32 %v464, %v465
  %v467 = vsub.f32 1.0, %v466
  %v468 = vmul.f32 %v465, %v467
  %v469 = vadd.f32 %v465, %v468
  %vm470 = vweird.f32 %v464
  %vm471 = vweird.f32 %v465
  %vm472 = vmor %vm470, %vm471
  %v473 = vsel %vm472, %v465, %v469
  %v474 = vand.u32 2147483647, %v464
  %vm475 = vcmp.eq.f32.partialorder %v474, 8.507059e+37
  %v476 = vand.u32 %v464, 2147483648
  %v477 = vor.u32 1.1754944e-38, %v476
  %v478 = vsel %vm475, %v477, %v473
  %v479 = vmul.f32 1.0, %v478
  %v480 = vtanh.pop %v460
  %v481 = vmul.f32 %v479, %v428
  %483 = vrot.lane.b32.xlu0 %v480, 32
  %v484 = vpop.permute.xlu0 %483
  %v486 = vmul.f32 %v479, %v484
  %488 = vrot.lane.b32.xlu0 %v486, 32
  %v489 = vpop.permute.xlu0 %488
  %v491 = vadd.f32 %v481, %v489
  %v492 = vtanh.pop %v491
  %494 = vrot.lane.b32.xlu0 %v492, 32
  %v495 = vpop.permute.xlu0 %494
  %v497 = vmul.f32 %v479, %v495
  %499 = vrot.lane.b32.xlu0 %v497, 64
  %v500 = vpop.permute.xlu0 %499
  %v501 = vsel %vm117, %v500, 0
  %503 = vmatpush.msra.mxu0 0.0
  %504 = vmatpush.msra.mxu0 0.0
  %505 = vmatpush.msra.mxu0 0.0
  %506 = vmatpush.msra.mxu0 0.0
  %507 = vmatpush.msra.mxu0 0.0
  %508 = vmatpush.msra.mxu0 0.0
  %509 = vmatpush.msra.mxu0 0.0
  %510 = vmatpush.msra.mxu0 0.0
  %511 = vmatpush.msra.mxu0 0.0
  %512 = vmatpush.msra.mxu0 0.0
  %513 = vmatpush.msra.mxu0 0.0
  %514 = vmatpush.msra.mxu0 0.0
  %515 = vmatpush.msra.mxu0 %v114
  %516 = vmatpush.msra.mxu0 %v113
  %517 = vmatpush.msra.mxu0 %v112
  %518 = vmatpush.msra.mxu0 %v111
  %519 = vmatmul.f32.gmra.mxu0 %v501
  %v520 = vpop.f32.mrf.mxu0
  %v521 = vadd.f32 0.0, %v520
  %522 = vdwg.mxu0
  %v523 = vadd.f32 %v106, %v521
  %v524 = vxor.u32 %v523, 2147483648
  %v525 = vmul.f32 %v524, 1.442695
  %v526 = vpow.pop %v525
  %v527 = vadd.f32 %v526, 1.0
  %v528 = vrcp.pop %v527
  %v529 = vmul.f32 %v527, %v528
  %v530 = vsub.f32 1.0, %v529
  %v531 = vmul.f32 %v528, %v530
  %v532 = vadd.f32 %v528, %v531
  %vm533 = vweird.f32 %v527
  %vm534 = vweird.f32 %v528
  %vm535 = vmor %vm533, %vm534
  %v536 = vsel %vm535, %v528, %v532
  %v537 = vand.u32 2147483647, %v527
  %vm538 = vcmp.eq.f32.partialorder %v537, 8.507059e+37
  %v539 = vand.u32 %v527, 2147483648
  %v540 = vor.u32 1.1754944e-38, %v539
  %v541 = vsel %vm538, %v540, %v536
  %v542 = vmul.f32 1.0, %v541
  %v543 = vtanh.pop %v523
  %v544 = vmul.f32 %v542, %v491
  %546 = vrot.lane.b32.xlu0 %v543, 32
  %v547 = vpop.permute.xlu0 %546
  %v549 = vmul.f32 %v542, %v547
  %551 = vrot.lane.b32.xlu0 %v549, 32
  %v552 = vpop.permute.xlu0 %551
  %v554 = vadd.f32 %v544, %v552
  %v555 = vtanh.pop %v554
  %557 = vrot.lane.b32.xlu0 %v555, 32
  %v558 = vpop.permute.xlu0 %557
  %v560 = vmul.f32 %v542, %v558
  %562 = vrot.lane.b32.xlu0 %v560, 64
  %v563 = vpop.permute.xlu0 %562
  %v564 = vsel %vm117, %v563, 0
  %566 = vmatpush.msra.mxu0 0.0
  %567 = vmatpush.msra.mxu0 0.0
  %568 = vmatpush.msra.mxu0 0.0
  %569 = vmatpush.msra.mxu0 0.0
  %570 = vmatpush.msra.mxu0 0.0
  %571 = vmatpush.msra.mxu0 0.0
  %572 = vmatpush.msra.mxu0 0.0
  %573 = vmatpush.msra.mxu0 0.0
  %574 = vmatpush.msra.mxu0 0.0
  %575 = vmatpush.msra.mxu0 0.0
  %576 = vmatpush.msra.mxu0 0.0
  %577 = vmatpush.msra.mxu0 0.0
  %578 = vmatpush.msra.mxu0 %v114
  %579 = vmatpush.msra.mxu0 %v113
  %580 = vmatpush.msra.mxu0 %v112
  %581 = vmatpush.msra.mxu0 %v111
  %582 = vmatmul.f32.gmra.mxu0 %v564
  %v583 = vpop.f32.mrf.mxu0
  %v584 = vadd.f32 0.0, %v583
  %585 = vdwg.mxu0
  %v586 = vadd.f32 %v109, %v584
  %v587 = vxor.u32 %v586, 2147483648
  %v588 = vmul.f32 %v587, 1.442695
  %v589 = vpow.pop %v588
  %v590 = vadd.f32 %v589, 1.0
  %v591 = vrcp.pop %v590
  %v592 = vmul.f32 %v590, %v591
  %v593 = vsub.f32 1.0, %v592
  %v594 = vmul.f32 %v591, %v593
  %v595 = vadd.f32 %v591, %v594
  %vm596 = vweird.f32 %v590
  %vm597 = vweird.f32 %v591
  %vm598 = vmor %vm596, %vm597
  %v599 = vsel %vm598, %v591, %v595
  %v600 = vand.u32 2147483647, %v590
  %vm601 = vcmp.eq.f32.partialorder %v600, 8.507059e+37
  %v602 = vand.u32 %v590, 2147483648
  %v603 = vor.u32 1.1754944e-38, %v602
  %v604 = vsel %vm601, %v603, %v599
  %v605 = vmul.f32 1.0, %v604
  %v606 = vtanh.pop %v586
  %v607 = vmul.f32 %v605, %v554
  %609 = vrot.lane.b32.xlu0 %v606, 32
  %v610 = vpop.permute.xlu0 %609
  %v612 = vmul.f32 %v605, %v610
  %614 = vrot.lane.b32.xlu0 %v612, 32
  %v615 = vpop.permute.xlu0 %614
  %v617 = vadd.f32 %v607, %v615
  %v618 = vtanh.pop %v617
  %620 = vrot.lane.b32.xlu0 %v618, 32
  %v621 = vpop.permute.xlu0 %620
  %v623 = vmul.f32 %v605, %v621
  %v624 = vld [vmem:[%s6] sm:$0xff]
  %v625 = vld [vmem:[%s6 + $0x8] sm:$0xff]
  %v626 = vld [vmem:[%s6 + $0x10] sm:$0xff]
  %v627 = vld [vmem:[%s6 + $0x18] sm:$0xff]
  %v628 = vld [vmem:[%s7] sm:$0x1]
  %v630 = vperm.slane %v628, 0
  %633 = vrot.lane.b32.xlu0 %v623, 64
  %v634 = vpop.permute.xlu0 %633
  %v635 = vsel %vm117, %v634, 0
  %637 = vmatpush.msra.mxu0 0.0
  %638 = vmatpush.msra.mxu0 0.0
  %639 = vmatpush.msra.mxu0 0.0
  %640 = vmatpush.msra.mxu0 0.0
  %641 = vmatpush.msra.mxu0 0.0
  %642 = vmatpush.msra.mxu0 0.0
  %643 = vmatpush.msra.mxu0 0.0
  %644 = vmatpush.msra.mxu0 0.0
  %645 = vmatpush.msra.mxu0 0.0
  %646 = vmatpush.msra.mxu0 0.0
  %647 = vmatpush.msra.mxu0 0.0
  %648 = vmatpush.msra.mxu0 0.0
  %649 = vmatpush.msra.mxu0 %v627
  %650 = vmatpush.msra.mxu0 %v626
  %651 = vmatpush.msra.mxu0 %v625
  %652 = vmatpush.msra.mxu0 %v624
  %653 = vmatmul.f32.gmra.mxu0 %v186
  %v654 = vpop.f32.mrf.mxu0
  %v655 = vadd.f32 %v630, %v654
  %656 = vmatmul.f32.gmra.mxu0 %v249
  %v657 = vpop.f32.mrf.mxu0
  %v658 = vadd.f32 %v630, %v657
  %659 = vmatmul.f32.gmra.mxu0 %v312
  %v660 = vpop.f32.mrf.mxu0
  %v661 = vadd.f32 %v630, %v660
  %662 = vmatmul.f32.gmra.mxu0 %v375
  %v663 = vpop.f32.mrf.mxu0
  %v664 = vadd.f32 %v630, %v663
  %665 = vmatmul.f32.gmra.mxu0 %v438
  %v666 = vpop.f32.mrf.mxu0
  %v667 = vadd.f32 %v630, %v666
  %668 = vmatmul.f32.gmra.mxu0 %v501
  %v669 = vpop.f32.mrf.mxu0
  %v670 = vadd.f32 %v630, %v669
  %671 = vmatmul.f32.gmra.mxu0 %v564
  %v672 = vpop.f32.mrf.mxu0
  %v673 = vadd.f32 %v630, %v672
  %674 = vmatmul.f32.gmra.mxu0 %v635
  %v675 = vpop.f32.mrf.mxu0
  %v676 = vadd.f32 %v630, %v675
  %677 = vdwg.mxu0
  %678 = vst [vmem:[%s8] sm:$0xff] %v655
  %679 = vst [vmem:[%s8 + $0x8] sm:$0xff] %v658
  %680 = vst [vmem:[%s8 + $0x10] sm:$0xff] %v661
  %681 = vst [vmem:[%s8 + $0x18] sm:$0xff] %v664
  %682 = vst [vmem:[%s8 + $0x20] sm:$0xff] %v667
  %683 = vst [vmem:[%s8 + $0x28] sm:$0xff] %v670
  %684 = vst [vmem:[%s8 + $0x30] sm:$0xff] %v673
  %685 = vst [vmem:[%s8 + $0x38] sm:$0xff] %v676
  %v687 = vsel %vm117, %v634, %v617
  %vm688 = vcmask 523264
  %v689 = vsel %vm688, %v687, 0.0
  %690 = vst [vmem:[%s9] sm:$0xff] %v689
  // Predicated region
  $region34: #{prednet_forward.1} parent=0 // pred_check
    _
  $region35: #{prednet_forward.1} parent=0 // pred_check_branch
    %692 = sbr.rel (0) target = $region37
  $region36: #{prednet_forward.1} parent=0 // pred_region
    _
  $region37: #{prednet_forward.1} parent=0 // pred_fallthru
    _
  // Predicated region
  $region38: #{prednet_forward.1} parent=0 // pred_check
    _
  $region39: #{prednet_forward.1} parent=0 // pred_check_branch
    %694 = sbr.rel (0) target = $region41
  $region40: #{prednet_forward.1} parent=0 // pred_region
    _
  $region41: #{prednet_forward.1} parent=0 // pred_fallthru
    _
  // Predicated region
  $region42: #{prednet_forward.1} parent=0 // pred_check
    _
  $region43: #{prednet_forward.1} parent=0 // pred_check_branch
    %696 = sbr.rel (0) target = $region45
  $region44: #{prednet_forward.1} parent=0 // pred_region
    _
  $region45: #{prednet_forward.1} parent=0 // pred_fallthru
    _
  // Predicated region
  $region46: #{prednet_forward.1} parent=0 // pred_check
    _
  $region47: #{prednet_forward.1} parent=0 // pred_check_branch
    %698 = sbr.rel (0) target = $region49
  $region48: #{prednet_forward.1} parent=0 // pred_region
    _
  $region49: #{prednet_forward.1} parent=0 // pred_fallthru
    _

</llo_original>
